<compile_context>
chip_gen: v5e
topology: v5e:2x2
jax: 0.10.0
libtpu: 0.0.40
codegen_flags: <defaults>
</compile_context>

<pallas_src>
import functools

import jax
import jax.numpy as jnp
from jax.experimental import pallas as pl
from jax.experimental.pallas import tpu as pltpu

LANE = 128
SUB = 8


def _round_up(n, m):
    return ((n + m - 1) // m) * m


def mlp_kernel(x_ref, w1_ref, b1_ref, w2_ref, b2_ref, o_ref):
    # Weights arrive pre-cast to bf16 (setup time); only x needs a cast here.
    x = x_ref[...].astype(jnp.bfloat16)
    h = jnp.dot(x, w1_ref[...], preferred_element_type=jnp.float32)    # MXU, f32 acc
    h = jnp.maximum(h + b1_ref[...], 0.0).astype(jnp.bfloat16)         # fused bias+ReLU+cast (VPU)
    y = jnp.dot(h, w2_ref[...], preferred_element_type=jnp.float32)    # MXU, f32 acc
    o_ref[...] = (y + b2_ref[...]).astype(o_ref.dtype)


def prepare_params(w1, b1, w2, b2):
    """One-time setup: lane-pad hidden/output dims to 128 and cast weights to bf16.

    Padding is numerically inert: padded hidden lanes see relu(0 + 0) = 0 and the
    padded rows of W2 contribute nothing; padded output lanes are sliced off in the
    wrapper. bf16 MXU operands (with f32 accumulation) are an intentional numerics
    deviation from the f32 PyTorch reference.
    """
    I, H = w1.shape
    O = w2.shape[1]
    H_pad = _round_up(H, LANE)
    O_pad = _round_up(O, LANE)
    w1p = jnp.pad(jnp.asarray(w1, jnp.float32), ((0, 0), (0, H_pad - H))).astype(jnp.bfloat16)
    b1p = jnp.pad(jnp.asarray(b1, jnp.float32).reshape(1, H), ((0, 0), (0, H_pad - H)))
    w2p = jnp.pad(jnp.asarray(w2, jnp.float32),
                  ((0, H_pad - H), (0, O_pad - O))).astype(jnp.bfloat16)
    b2p = jnp.pad(jnp.asarray(b2, jnp.float32).reshape(1, O), ((0, 0), (0, O_pad - O)))
    return w1p, b1p, w2p, b2p, O


@functools.partial(jax.jit, static_argnames=("out_features", "block_b", "min_grid_b"))
def simple_model_forward(x, w1p, b1p, w2p, b2p, *, out_features,
                         block_b=2048, min_grid_b=256):
    """x: (B, I), any float dtype (kept native; cast to bf16 in-kernel).
    Params come from prepare_params(). Returns (B, out_features) float32."""
    B, I = x.shape
    H_pad = w1p.shape[1]
    O_pad = w2p.shape[1]

    if B <= min_grid_b:
        # Tiny batch: single block, no grid loop / pipeline prologue,
        # everything resident in VMEM for the whole call.
        out = pl.pallas_call(
            mlp_kernel,
            out_shape=jax.ShapeDtypeStruct((B, O_pad), jnp.float32),
            in_specs=[pl.BlockSpec(memory_space=pltpu.MemorySpace.VMEM)] * 5,
            out_specs=pl.BlockSpec(memory_space=pltpu.MemorySpace.VMEM),
        )(x, w1p, b1p, w2p, b2p)
    else:
        # Batch-only grid, no batch padding of x (Pallas masks the partial last
        # tile's output write; garbage rows read past x only affect masked rows).
        # TB chosen so nb >= 2 -> v7x's two TensorCores both get tiles ("parallel").
        TB = min(_round_up(block_b, SUB), _round_up(pl.cdiv(B, 2), SUB))
        nb = pl.cdiv(B, TB)
        out = pl.pallas_call(
            mlp_kernel,
            out_shape=jax.ShapeDtypeStruct((B, O_pad), jnp.float32),
            grid=(nb,),
            in_specs=[
                pl.BlockSpec((TB, I), lambda i: (i, 0)),       # x tiles: auto-pipelined
                pl.BlockSpec((I, H_pad), lambda i: (0, 0)),    # weights/biases: block (0,0)
                pl.BlockSpec((1, H_pad), lambda i: (0, 0)),    #   every step -> VMEM-resident,
                pl.BlockSpec((H_pad, O_pad), lambda i: (0, 0)),#   DMA'd once
                pl.BlockSpec((1, O_pad), lambda i: (0, 0)),
            ],
            out_specs=pl.BlockSpec((TB, O_pad), lambda i: (i, 0)),
            # TODO(synk): if very large B on v5e exposes DMA latency, sweep
            # pipeline_mode=pl.Buffered(3) on the x/out specs.
            compiler_params=pltpu.CompilerParams(
                dimension_semantics=("parallel",),
            ),
        )(x, w1p, b1p, w2p, b2p)

    # Drop padded output lanes (batch axis is already exact -> no batch slice).
    return out[:, :out_features]


class SimpleModelPallas:
    """Mirror of the PyTorch SimpleModel forward: Linear -> ReLU -> Linear."""

    def __init__(self, w1, b1, w2, b2, *, block_b=2048, min_grid_b=256):
        self.w1p, self.b1p, self.w2p, self.b2p, self.out_features = prepare_params(w1, b1, w2, b2)
        self.block_b = block_b
        self.min_grid_b = min_grid_b

    def __call__(self, x):
        return simple_model_forward(
            x, self.w1p, self.b1p, self.w2p, self.b2p,
            out_features=self.out_features,
            block_b=self.block_b, min_grid_b=self.min_grid_b)


def _ref_forward_bf16(x, w1, b1, w2, b2):
    # Same numerics as the kernel: bf16 MXU operands, f32 accumulation, f32 bias/ReLU.
    h = jnp.dot(x.astype(jnp.bfloat16), w1.astype(jnp.bfloat16),
                preferred_element_type=jnp.float32) + b1.reshape(1, -1)
    h = jnp.maximum(h, 0.0).astype(jnp.bfloat16)
    y = jnp.dot(h, w2.astype(jnp.bfloat16),
                preferred_element_type=jnp.float32) + b2.reshape(1, -1)
    return y


if __name__ == "__main__":
    # Shapes implied by the module: input_size=32, hidden_size=64, output_size=16, batch=8
    batch, input_size, hidden_size, output_size = 8, 32, 64, 16

    key = jax.random.PRNGKey(0)
    kx, k1, kb1, k2, kb2 = jax.random.split(key, 5)

    x = jax.random.normal(kx, (batch, input_size), dtype=jnp.float32)

    # Deterministic parameter init (uniform, Kaiming-style bound like nn.Linear default)
    bound1 = 1.0 / (input_size ** 0.5)
    w1 = jax.random.uniform(k1, (input_size, hidden_size), jnp.float32, -bound1, bound1)
    b1 = jax.random.uniform(kb1, (hidden_size,), jnp.float32, -bound1, bound1)

    bound2 = 1.0 / (hidden_size ** 0.5)
    w2 = jax.random.uniform(k2, (hidden_size, output_size), jnp.float32, -bound2, bound2)
    b2 = jax.random.uniform(kb2, (output_size,), jnp.float32, -bound2, bound2)

    model = SimpleModelPallas(w1, b1, w2, b2)

    # --- path 1: small batch -> single-block, no-grid kernel ------------------
    out = model(x)
    jax.block_until_ready(out)
    assert out.shape == (batch, output_size)

    ref_bf16 = _ref_forward_bf16(x, w1, b1, w2, b2)
    ref_f32 = jnp.maximum(x @ w1 + b1.reshape(1, -1), 0.0) @ w2 + b2.reshape(1, -1)
    assert jnp.allclose(out, ref_bf16, atol=2e-3, rtol=2e-3)
    assert jnp.allclose(out, ref_f32, atol=5e-2, rtol=5e-2)

    # --- path 2: batch-tiled "parallel" grid path (nb=2, partial last tile) ---
    big_batch = 300  # > min_grid_b=256, not a multiple of the tile -> masked last tile
    xb = jax.random.normal(jax.random.PRNGKey(1), (big_batch, input_size), jnp.float32)
    out_b = model(xb)
    jax.block_until_ready(out_b)
    assert out_b.shape == (big_batch, output_size)
    ref_b = _ref_forward_bf16(xb, w1, b1, w2, b2)
    assert jnp.allclose(out_b, ref_b, atol=2e-3, rtol=2e-3)

    print("KERNEL_OK")
</pallas_src>

<mosaic_0001>
module attributes {stable_mosaic.version = 11 : i64} {
  func.func @mlp_kernel(%arg0: memref<8x32xf32, #tpu.memory_space<vmem>>, %arg1: memref<32x128xbf16, #tpu.memory_space<vmem>>, %arg2: memref<1x128xf32, #tpu.memory_space<vmem>>, %arg3: memref<128x128xbf16, #tpu.memory_space<vmem>>, %arg4: memref<1x128xf32, #tpu.memory_space<vmem>>, %arg5: memref<8x128xf32, #tpu.memory_space<vmem>>) attributes {dimension_semantics = [], scalar_prefetch = 0 : i64, scratch_operands = 0 : i64, tpu.core_type = #tpu.core_type<tc>} {
    %c0 = arith.constant 0 : index
    %c0_0 = arith.constant 0 : index
    %0 = vector.load %arg0[%c0, %c0_0] : memref<8x32xf32, #tpu.memory_space<vmem>>, vector<8x32xf32>
    %1 = arith.truncf %0 : vector<8x32xf32> to vector<8x32xbf16>
    %c0_1 = arith.constant 0 : index
    %c0_2 = arith.constant 0 : index
    %2 = vector.load %arg1[%c0_1, %c0_2] : memref<32x128xbf16, #tpu.memory_space<vmem>>, vector<32x128xbf16>
    %cst = arith.constant dense<0.000000e+00> : vector<8x128xf32>
    %3 = tpu.matmul %1, %2, %cst {dimension_numbers = #tpu.dot_dimension_numbers<[1], [0], [0], [1], [0, 0, 1, 1], [], []>} : vector<8x32xbf16>, vector<32x128xbf16>, vector<8x128xf32> -> vector<8x128xf32>
    %c0_3 = arith.constant 0 : index
    %c0_4 = arith.constant 0 : index
    %4 = vector.load %arg2[%c0_3, %c0_4] : memref<1x128xf32, #tpu.memory_space<vmem>>, vector<1x128xf32>
    %5 = vector.broadcast %4 : vector<1x128xf32> to vector<8x128xf32>
    %6 = arith.addf %3, %5 : vector<8x128xf32>
    %cst_5 = arith.constant 0.000000e+00 : f32
    %7 = vector.broadcast %cst_5 : f32 to vector<8x128xf32>
    %8 = arith.maximumf %6, %7 : vector<8x128xf32>
    %9 = arith.truncf %8 : vector<8x128xf32> to vector<8x128xbf16>
    %c0_6 = arith.constant 0 : index
    %c0_7 = arith.constant 0 : index
    %10 = vector.load %arg3[%c0_6, %c0_7] : memref<128x128xbf16, #tpu.memory_space<vmem>>, vector<128x128xbf16>
    %cst_8 = arith.constant dense<0.000000e+00> : vector<8x128xf32>
    %11 = tpu.matmul %9, %10, %cst_8 {dimension_numbers = #tpu.dot_dimension_numbers<[1], [0], [0], [1], [0, 0, 1, 1], [], []>} : vector<8x128xbf16>, vector<128x128xbf16>, vector<8x128xf32> -> vector<8x128xf32>
    %c0_9 = arith.constant 0 : index
    %c0_10 = arith.constant 0 : index
    %12 = vector.load %arg4[%c0_9, %c0_10] : memref<1x128xf32, #tpu.memory_space<vmem>>, vector<1x128xf32>
    %13 = vector.broadcast %12 : vector<1x128xf32> to vector<8x128xf32>
    %14 = arith.addf %11, %13 : vector<8x128xf32>
    %c0_11 = arith.constant 0 : index
    %c0_12 = arith.constant 0 : index
    %15 = vector.load %arg5[%c0_11, %c0_12] : memref<8x128xf32, #tpu.memory_space<vmem>>, vector<8x128xf32>
    tpu.vector_store %arg5[%c0_11, %c0_12], %14 {strides = array<i32>} : memref<8x128xf32, #tpu.memory_space<vmem>>, vector<8x128xf32>,
    return
  }
}

</mosaic_0001>

<llo_original>
// kernel: simple_model_forward.1
$region0: #{simple_model_forward.1}
  #allocation0 [shape = 'u32[]', space=smem, size = 0x4, offset = 0x4, fixed_abs, tag = 'smem constant byte address 0x4 - core index']
  #allocation1 [shape = 'u32[72,128]{1,0:T(1,128)}', space=vmem, size = 0x9000, scoped, tag = 'internal scratch']
  %s0 = inlined_call_operand.hbm [shape: f32[8,32], index: 0, kind: input, shape index: {}]
  %s1 = inlined_call_operand.hbm [shape: bf16[32,128], index: 1, kind: input, shape index: {}]
  %s2 = inlined_call_operand.vmem [shape: f32[1,128], index: 2, kind: input, shape index: {}]
  %s3 = inlined_call_operand.hbm [shape: bf16[128,128], index: 3, kind: input, shape index: {}]
  %s4 = inlined_call_operand.vmem [shape: f32[1,128], index: 4, kind: input, shape index: {}]
  %s5 = inlined_call_operand.hbm [shape: f32[8,128], index: 5, kind: output, shape index: {}]
  %s6 = sld [smem:[#allocation0]]
  $region42: #{simple_model_forward.1} parent=0
    _
  %s8 = ssub.s32 1, %s6
  %s9 = scalar_select 0, %s8, %s6
  $region1: #{simple_model_forward.1} parent=0
    #allocation2 [shape = 'u8[4096]{0}', space=vmem, size = 0x1000, scoped, tag = 'input window, operand 0, single buffered']
    #allocation3 [shape = 's32[1]{0}', space=sflag, size = 0x4, scoped, tag = 'scoped memory for simple_model_forward.1']
    #allocation4 [shape = 's32[1]{0}', space=sflag, size = 0x4, scoped, tag = 'scoped memory for simple_model_forward.1']
    #allocation5 [shape = 'u8[8192]{0}', space=vmem, size = 0x2000, scoped, tag = 'input window, operand 1, single buffered']
    #allocation6 [shape = 's32[1]{0}', space=sflag, size = 0x4, scoped, tag = 'scoped memory for simple_model_forward.1']
    #allocation7 [shape = 'u8[32768]{0}', space=vmem, size = 0x8000, scoped, tag = 'input window, operand 3, single buffered']
    #allocation8 [shape = 'u8[4096]{0}', space=vmem, size = 0x1000, scoped, tag = 'output window, operand 0, single buffered']
    %10 = vsyncpa [#allocation3], 0
    %11 = vsyncpa [#allocation6], 0
    %12 = vsyncpa [#allocation4], 0
    // Predicated region
    $region2: #{simple_model_forward.1} parent=1 // pred_check
      _
    $region3: #{simple_model_forward.1} parent=1 // pred_check_branch
      %14 = sbr.rel (0) target = $region5
    $region4: #{simple_model_forward.1} parent=1 // pred_region
      %16 = vsyncadd [#allocation3], 0
      %s18 = sshll.u32 %s0, 4
      %s19 = int_to_ptr.hbm [resolvable:$true] %s18
      %s20 = sshll.u32 [#allocation2], 4
      %s21 = int_to_ptr.vmem [resolvable:$true] %s20
      %23 = dma.hbm_to_vmem [thread:$0]  %s19, 128, %s21, [#allocation3]
    $region5: #{simple_model_forward.1} parent=1 // pred_fallthru
      _
    // Predicated region
    $region6: #{simple_model_forward.1} parent=1 // pred_check
      _
    $region7: #{simple_model_forward.1} parent=1 // pred_check_branch
      %25 = sbr.rel (0) target = $region9
    $region8: #{simple_model_forward.1} parent=1 // pred_region
      %27 = vsyncadd [#allocation6], 0
      %s28 = sshll.u32 %s1, 4
      %s29 = int_to_ptr.hbm [resolvable:$true] %s28
      %s30 = sshll.u32 [#allocation5], 4
      %s31 = int_to_ptr.vmem [resolvable:$true] %s30
      %36 = dma.hbm_to_vmem [thread:$0]  %s29, 256, %s31, [#allocation6], 64, 64, 4
    $region9: #{simple_model_forward.1} parent=1 // pred_fallthru
      _
    // Predicated region
    $region10: #{simple_model_forward.1} parent=1 // pred_check
      _
    $region11: #{simple_model_forward.1} parent=1 // pred_check_branch
      %38 = sbr.rel (0) target = $region13
    $region12: #{simple_model_forward.1} parent=1 // pred_region
      _
    $region13: #{simple_model_forward.1} parent=1 // pred_fallthru
      _
    // Predicated region
    $region14: #{simple_model_forward.1} parent=1 // pred_check
      _
    $region15: #{simple_model_forward.1} parent=1 // pred_check_branch
      %40 = sbr.rel (0) target = $region17
    $region16: #{simple_model_forward.1} parent=1 // pred_region
      %42 = vsyncadd [#allocation6], 0
      %s43 = sshll.u32 %s3, 4
      %s44 = int_to_ptr.hbm [resolvable:$true] %s43
      %s45 = sshll.u32 [#allocation7], 4
      %s46 = int_to_ptr.vmem [resolvable:$true] %s45
      %51 = dma.hbm_to_vmem [thread:$0]  %s44, 1024, %s46, [#allocation6], 64, 64, 4
    $region17: #{simple_model_forward.1} parent=1 // pred_fallthru
      _
    // Predicated region
    $region18: #{simple_model_forward.1} parent=1 // pred_check
      _
    $region19: #{simple_model_forward.1} parent=1 // pred_check_branch
      %53 = sbr.rel (0) target = $region21
    $region20: #{simple_model_forward.1} parent=1 // pred_region
      _
    $region21: #{simple_model_forward.1} parent=1 // pred_fallthru
      _
    // Predicated region
    $region22: #{simple_model_forward.1} parent=1 // pred_check
      _
    $region23: #{simple_model_forward.1} parent=1 // pred_check_branch
      %55 = sbr.rel (0) target = $region25
    $region24: #{simple_model_forward.1} parent=1 // pred_region
      %57 = dma.done [#allocation3], 128
    $region25: #{simple_model_forward.1} parent=1 // pred_fallthru
      _
    // Predicated region
    $region26: #{simple_model_forward.1} parent=1 // pred_check
      _
    $region27: #{simple_model_forward.1} parent=1 // pred_check_branch
      %59 = sbr.rel (0) target = $region29
    $region28: #{simple_model_forward.1} parent=1 // pred_region
      %61 = dma.done [#allocation6], 256
    $region29: #{simple_model_forward.1} parent=1 // pred_fallthru
      _
    // Predicated region
    $region30: #{simple_model_forward.1} parent=1 // pred_check
      _
    $region31: #{simple_model_forward.1} parent=1 // pred_check_branch
      %63 = sbr.rel (0) target = $region33
    $region32: #{simple_model_forward.1} parent=1 // pred_region
      %65 = dma.done [#allocation6], 1024
    $region33: #{simple_model_forward.1} parent=1 // pred_fallthru
      _
    %v67 = vld [vmem:[#allocation2] sm:$0xff]
    %v68 = vpack.c.bf16 %v67, %v67
    %v69 = vld [vmem:[#allocation5] sm:$0xf]
    %v70 = vld [vmem:[#allocation5 + $0x4] sm:$0xf]
    %v71 = vld [vmem:[#allocation5 + $0x8] sm:$0xf]
    %v72 = vld [vmem:[#allocation5 + $0xc] sm:$0xf]
    %v73 = vld [vmem:[%s2] sm:$0x1]
    %v75 = vperm.slane %v73, 0
    %v81 = vunpack.c.l.b16 %v69
    %v82 = vunpack.c.l.b16 %v70
    %v83 = vunpack.c.l.b16 %v71
    %v84 = vunpack.c.l.b16 %v72
    %v85 = vpack.c.b16 %v82, %v81
    %v86 = vpack.c.b16 %v84, %v83
    %vm89 = vcmask 261120
    %v91 = vsel %vm89, %v68, 0
    %93 = vmatpush.bf16.msra.mxu0 0
    %94 = vmatpush.bf16.msra.mxu0 0
    %95 = vmatpush.bf16.msra.mxu0 0
    %96 = vmatpush.bf16.msra.mxu0 0
    %97 = vmatpush.bf16.msra.mxu0 0
    %98 = vmatpush.bf16.msra.mxu0 0
    %99 = vmatpush.bf16.msra.mxu0 %v86
    %100 = vmatpush.bf16.msra.mxu0 %v85
    %101 = vmatmul.bf16.gmra.mxu0 %v91
    %v102 = vpop.f32.mrf.mxu0
    %v103 = vadd.f32 %v75, %v102
    %v104 = vpop.f32.mrf.mxu0
    %105 = vdwg.mxu0
    %v106 = vmax.f32 %v103, 0.0
    %v107 = vpack.c.bf16 %v106, %v106
    %v108 = vld [vmem:[#allocation7] sm:$0xf]
    %v109 = vld [vmem:[#allocation7 + $0x4] sm:$0xf]
    %v110 = vld [vmem:[#allocation7 + $0x8] sm:$0xf]
    %v111 = vld [vmem:[#allocation7 + $0xc] sm:$0xf]
    %v112 = vld [vmem:[#allocation7 + $0x10] sm:$0xf]
    %v113 = vld [vmem:[#allocation7 + $0x14] sm:$0xf]
    %v114 = vld [vmem:[#allocation7 + $0x18] sm:$0xf]
    %v115 = vld [vmem:[#allocation7 + $0x1c] sm:$0xf]
    %v116 = vld [vmem:[#allocation7 + $0x20] sm:$0xf]
    %v117 = vld [vmem:[#allocation7 + $0x24] sm:$0xf]
    %v118 = vld [vmem:[#allocation7 + $0x28] sm:$0xf]
    %v119 = vld [vmem:[#allocation7 + $0x2c] sm:$0xf]
    %v120 = vld [vmem:[#allocation7 + $0x30] sm:$0xf]
    %v121 = vld [vmem:[#allocation7 + $0x34] sm:$0xf]
    %v122 = vld [vmem:[#allocation7 + $0x38] sm:$0xf]
    %v123 = vld [vmem:[#allocation7 + $0x3c] sm:$0xf]
    %v124 = vld [vmem:[%s4] sm:$0x1]
    %v126 = vperm.slane %v124, 0
    %v144 = vunpack.c.l.b16 %v108
    %v145 = vunpack.c.l.b16 %v109
    %v146 = vunpack.c.l.b16 %v110
    %v147 = vunpack.c.l.b16 %v111
    %v148 = vunpack.c.l.b16 %v112
    %v149 = vunpack.c.l.b16 %v113
    %v150 = vunpack.c.l.b16 %v114
    %v151 = vunpack.c.l.b16 %v115
    %v152 = vunpack.c.l.b16 %v116
    %v153 = vunpack.c.l.b16 %v117
    %v154 = vunpack.c.l.b16 %v118
    %v155 = vunpack.c.l.b16 %v119
    %v156 = vunpack.c.l.b16 %v120
    %v157 = vunpack.c.l.b16 %v121
    %v158 = vunpack.c.l.b16 %v122
    %v159 = vunpack.c.l.b16 %v123
    %v160 = vpack.c.b16 %v145, %v144
    %v161 = vpack.c.b16 %v147, %v146
    %v162 = vpack.c.b16 %v149, %v148
    %v163 = vpack.c.b16 %v151, %v150
    %v164 = vpack.c.b16 %v153, %v152
    %v165 = vpack.c.b16 %v155, %v154
    %v166 = vpack.c.b16 %v157, %v156
    %v167 = vpack.c.b16 %v159, %v158
    %176 = vmatpush.bf16.msra.mxu0 %v167
    %177 = vmatpush.bf16.msra.mxu0 %v166
    %178 = vmatpush.bf16.msra.mxu0 %v165
    %179 = vmatpush.bf16.msra.mxu0 %v164
    %180 = vmatpush.bf16.msra.mxu0 %v163
    %181 = vmatpush.bf16.msra.mxu0 %v162
    %182 = vmatpush.bf16.msra.mxu0 %v161
    %183 = vmatpush.bf16.msra.mxu0 %v160
    %184 = vmatmul.bf16.gmra.mxu0 %v107
    %v185 = vpop.f32.mrf.mxu0
    %v186 = vadd.f32 %v126, %v185
    %v187 = vpop.f32.mrf.mxu0
    %188 = vdwg.mxu0
    %189 = vst [vmem:[#allocation8] sm:$0xff] %v186
    // Predicated region
    $region34: #{simple_model_forward.1} parent=1 // pred_check
      _
    $region35: #{simple_model_forward.1} parent=1 // pred_check_branch
      %191 = sbr.rel (0) target = $region37
    $region36: #{simple_model_forward.1} parent=1 // pred_region
      %193 = vsyncadd [#allocation4], 0
      %s195 = sshll.u32 [#allocation8], 4
      %s196 = int_to_ptr.vmem [resolvable:$true] %s195
      %s197 = sshll.u32 %s5, 4
      %s198 = int_to_ptr.hbm [resolvable:$true] %s197
      %200 = dma.vmem_to_hbm [thread:$0]  %s196, 128, %s198, [#allocation4]
    $region37: #{simple_model_forward.1} parent=1 // pred_fallthru
      _
    // Predicated region
    $region38: #{simple_model_forward.1} parent=1 // pred_check
      _
    $region39: #{simple_model_forward.1} parent=1 // pred_check_branch
      %202 = sbr.rel (0) target = $region41
    $region40: #{simple_model_forward.1} parent=1 // pred_region
      %204 = dma.done [#allocation4], 128
    $region41: #{simple_model_forward.1} parent=1 // pred_fallthru
      _
    %205 = vsyncpa [#allocation3], 1
    %206 = vsyncpa [#allocation6], 1
    %207 = vsyncpa [#allocation4], 1

</llo_original>
